<compile_context>
chip_gen: v5e
topology: v5e:2x2
jax: 0.10.0
libtpu: 0.0.40
codegen_flags: <defaults>
</compile_context>

<pallas_src>
import numpy as np
import jax
import jax.numpy as jnp
from jax import lax
from jax.experimental import pallas as pl
from jax.experimental.pallas import tpu as pltpu

# ----------------------------- geometry -----------------------------
H_IN, W_IN = 52, 320          # input spatial size implied by Linear in_features
H1, W1 = 50, 318              # after conv1 (3x3, valid)
HP, WP = 25, 159              # after maxpool 2x2 stride 2
H2, W2 = 23, 157              # after conv2 (3x3, valid)
C1 = 64                       # conv1 output channels
C2 = 64                       # conv2 output channels
HID = 64
NCLS = 4
FEAT = C2 * H2 * W2           # 231104 (PyTorch Flatten size)

SROW = 160                    # padded row stride of the pooled / conv2 maps (>= WP)
S1 = HP * SROW                # 4000  flattened pooled slab (row-stride 160)
S1PAD = 4096                  # pooled slab padded to a lane-aligned width
S2F = H2 * SROW               # 3680  valid conv2 output slab (23 rows, stride 160)
S2PAD = 3712                  # 29*128, lane-aligned conv2 output slab (pad is don't-care)
FEAT_PAD = C2 * S2PAD         # 237568 padded FC feature size (zero weights on all pads)

TK_FC = FEAT_PAD // 4         # 59392 = 464*128; 4 K tiles cover FEAT_PAD exactly
NKB = FEAT_PAD // TK_FC       # 4


def _num_tensorcores():
    """2 on v7x (2 TensorCores/chip share the grid via 'parallel'); 1 otherwise."""
    try:
        kind = jax.devices()[0].device_kind.lower()
    except Exception:
        return 1
    return 2 if "v7" in kind else 1


NCORES = _num_tensorcores()
NKH = NKB // NCORES
assert S2PAD % 128 == 0 and TK_FC % 128 == 0
assert FEAT_PAD % TK_FC == 0 and NKB % NCORES == 0

# pltpu.roll direction is probed once at setup so the conv kernel is robust to
# either rotate convention (expected: np.roll semantics).
_ROLL_MATCHES_NP = None


def _detect_roll_semantics():
    global _ROLL_MATCHES_NP
    if _ROLL_MATCHES_NP is not None:
        return _ROLL_MATCHES_NP

    def k(x_ref, o_ref):
        o_ref[...] = pltpu.roll(x_ref[...], 1, axis=1)

    x = jnp.broadcast_to(jnp.arange(128, dtype=jnp.float32), (8, 128))
    y = pl.pallas_call(k, out_shape=jax.ShapeDtypeStruct((8, 128), jnp.float32))(x)
    v = int(y[0, 0])
    if v == 127:
        _ROLL_MATCHES_NP = True
    elif v == 1:
        _ROLL_MATCHES_NP = False
    else:
        raise RuntimeError(f"unexpected pltpu.roll probe result: {v}")
    return _ROLL_MATCHES_NP


# ----------------------------- Pallas kernels -----------------------------

def _conv_fused_kernel(p_ref, w1_ref, b1_ref, w2_ref, b2_ref, o_ref):
    """Fused conv1(1->64,3x3)+ReLU+maxpool(2x2) and conv2(64->64,3x3)+ReLU.

    One batch element per grid step.
      p:  (9, 4*S1PAD) f32 im2col patches of the input; lane chunk q holds pooling
          quadrant q in a (25 rows x stride-160) flattened layout.
      w1: (64, 9) f32, b1: (64, 1) f32.
      w2: (64, 576) bf16 — conv2 weight reshaped so one K=576 dot does all 9 taps.
      b2: (64, 1) f32.
      o:  (64, S2PAD) bf16 conv2+ReLU activations, row stride 160; columns 157..159
          of each row, rows 23..24 and columns S2F..S2PAD-1 are don't-care (the FC
          weight is zero there).
    """
    assert _ROLL_MATCHES_NP is not None

    w1 = w1_ref[...]

    def conv1(q):
        return jnp.dot(w1, p_ref[:, q * S1PAD:(q + 1) * S1PAD],
                       preferred_element_type=jnp.float32)

    m = conv1(0)
    for q in (1, 2, 3):
        m = jnp.maximum(m, conv1(q))
    # bf16 pooled slab: MXU-native input, halves the bytes moved by the rolls.
    pooled = jnp.maximum(m + b1_ref[...], 0.0).astype(jnp.bfloat16)   # (C1, S1PAD)

    # conv2: build the 9 lane-shifted views and do ONE K=576 MXU push.
    views = []
    for k in range(9):
        di, dj = divmod(k, 3)
        delta = di * SROW + dj
        if delta == 0:
            views.append(pooled)
        else:
            shift = (S1PAD - delta) if _ROLL_MATCHES_NP else delta
            views.append(pltpu.roll(pooled, shift, axis=1))  # view[:, p] = pooled[:, p+delta]
    win9 = jnp.concatenate(views, axis=0)                     # (9*C1, S1PAD) bf16

    acc = jnp.dot(w2_ref[...], win9,
                  preferred_element_type=jnp.float32)         # (C2, S1PAD) f32
    acc = acc + b2_ref[...]
    # 3712 = 29*128: lane-aligned prefix slice, dense (unmasked) store.
    o_ref[...] = jnp.maximum(acc[:, :S2PAD], 0.0).astype(o_ref.dtype)


def _fc_fused_kernel(x_ref, w_ref, fb1_ref, w2_ref, fb2_ref, o_ref, acc_ref):
    """Single-kernel FC path (1-TC chips): Linear(FEAT_PAD->64) streamed over K,
    with bias + ReLU + Linear(64->4) + softmax fused into the last K step.

    grid=(NKB,) arbitrary.  x: (N, TK_FC) bf16, w: (TK_FC, 64) bf16,
    fb1: (1, 64), w2: (64, 4), fb2: (1, 4), o: (N, 4) f32, acc: (N, 64) f32.
    """
    k = pl.program_id(0)

    @pl.when(k == 0)
    def _():
        acc_ref[...] = jnp.zeros_like(acc_ref)

    acc_ref[...] += jnp.dot(x_ref[...], w_ref[...],
                            preferred_element_type=jnp.float32)

    @pl.when(k == pl.num_programs(0) - 1)
    def _():
        h = jnp.maximum(acc_ref[...] + fb1_ref[...], 0.0)
        logits = jnp.dot(h, w2_ref[...],
                         preferred_element_type=jnp.float32) + fb2_ref[...]
        m = jnp.max(logits, axis=-1, keepdims=True)
        e = jnp.exp(logits - m)
        o_ref[...] = e / jnp.sum(e, axis=-1, keepdims=True)


def _fc_partial_kernel(x_ref, w_ref, o_ref, acc_ref):
    """Partial sums of Linear(FEAT_PAD->64) (v7x path).
    grid=(NCORES parallel, NKH arbitrary); each TensorCore streams half the weight.
    """
    k = pl.program_id(1)

    @pl.when(k == 0)
    def _():
        acc_ref[...] = jnp.zeros_like(acc_ref)

    acc_ref[...] += jnp.dot(x_ref[...], w_ref[...],
                            preferred_element_type=jnp.float32)

    @pl.when(k == pl.num_programs(1) - 1)
    def _():
        o_ref[...] = acc_ref[...]


def _fc_epilogue_kernel(p_ref, b1_ref, w2_ref, b2_ref, o_ref):
    """Combine per-core partials + bias + ReLU + Linear(64->4) + softmax (v7x path).
    p: (NCORES, N, 64), b1: (1, 64), w2: (64, 4), b2: (1, 4), o: (N, 4).
    """
    h = p_ref[0] + p_ref[1]
    h = jnp.maximum(h + b1_ref[...], 0.0)
    logits = jnp.dot(h, w2_ref[...],
                     preferred_element_type=jnp.float32) + b2_ref[...]
    m = jnp.max(logits, axis=-1, keepdims=True)
    e = jnp.exp(logits - m)
    o_ref[...] = e / jnp.sum(e, axis=-1, keepdims=True)


# ----------------------------- pallas_call wrappers -----------------------------

def _conv_fused(patches, w1f, b1, w2mat, b2):
    n = patches.shape[0]
    return pl.pallas_call(
        _conv_fused_kernel,
        out_shape=jax.ShapeDtypeStruct((n, C2, S2PAD), jnp.bfloat16),
        grid_spec=pltpu.PrefetchScalarGridSpec(
            num_scalar_prefetch=0,
            grid=(n,),
            in_specs=[pl.BlockSpec((None, 9, 4 * S1PAD), lambda i: (i, 0, 0)),
                      pl.BlockSpec((C1, 9), lambda i: (0, 0)),
                      pl.BlockSpec((C1, 1), lambda i: (0, 0)),
                      pl.BlockSpec((C2, 9 * C1), lambda i: (0, 0)),
                      pl.BlockSpec((C2, 1), lambda i: (0, 0))],
            out_specs=pl.BlockSpec((None, C2, S2PAD), lambda i: (i, 0, 0))),
        compiler_params=pltpu.CompilerParams(
            dimension_semantics=("parallel",),
            vmem_limit_bytes=32 * 1024 * 1024),
    )(patches, w1f, b1, w2mat, b2)


def _fc_fused(feat, w1p, fb1r, w2t, fb2r):
    n = feat.shape[0]
    return pl.pallas_call(
        _fc_fused_kernel,
        out_shape=jax.ShapeDtypeStruct((n, NCLS), jnp.float32),
        grid_spec=pltpu.PrefetchScalarGridSpec(
            num_scalar_prefetch=0,
            grid=(NKB,),
            in_specs=[pl.BlockSpec((n, TK_FC), lambda k: (0, k)),
                      pl.BlockSpec((TK_FC, HID), lambda k: (k, 0)),
                      pl.BlockSpec((1, HID), lambda k: (0, 0)),
                      pl.BlockSpec((HID, NCLS), lambda k: (0, 0)),
                      pl.BlockSpec((1, NCLS), lambda k: (0, 0))],
            out_specs=pl.BlockSpec((n, NCLS), lambda k: (0, 0)),
            scratch_shapes=[pltpu.VMEM((n, HID), jnp.float32)]),
        compiler_params=pltpu.CompilerParams(
            dimension_semantics=("arbitrary",),
            vmem_limit_bytes=32 * 1024 * 1024),   # ~15 MiB used; v5e default is 16 MiB
    )(feat, w1p, fb1r, w2t, fb2r)


def _fc_partial(feat, w1p):
    n = feat.shape[0]
    return pl.pallas_call(
        _fc_partial_kernel,
        out_shape=jax.ShapeDtypeStruct((NCORES, n, HID), jnp.float32),
        grid_spec=pltpu.PrefetchScalarGridSpec(
            num_scalar_prefetch=0,
            grid=(NCORES, NKH),
            in_specs=[pl.BlockSpec((n, TK_FC), lambda p, k: (0, p * NKH + k)),
                      pl.BlockSpec((TK_FC, HID), lambda p, k: (p * NKH + k, 0))],
            out_specs=pl.BlockSpec((None, n, HID), lambda p, k: (p, 0, 0)),
            scratch_shapes=[pltpu.VMEM((n, HID), jnp.float32)]),
        compiler_params=pltpu.CompilerParams(
            dimension_semantics=("parallel", "arbitrary"),
            vmem_limit_bytes=32 * 1024 * 1024),   # per-TC; v7x physical is 64 MiB/TC
    )(feat, w1p)


def _fc_epilogue(partials, fb1r, w2t, fb2r):
    n = partials.shape[1]
    return pl.pallas_call(
        _fc_epilogue_kernel,
        out_shape=jax.ShapeDtypeStruct((n, NCLS), jnp.float32),
    )(partials, fb1r, w2t, fb2r)


# ----------------------------- plain-JAX glue -----------------------------

def _conv1_pool_patches(x2d):
    """x2d: (N, 52, 320) -> (N, 9, 4*S1PAD) im2col patches.

    Lane chunk q = 2*a+b holds pooling quadrant (a, b); inside a chunk, position
    i*160 + j (i<25, j<159) holds x[a+2i+di, b+2j+dj] for tap (di, dj); the rest
    is zero padding.  Total ~1.2 MiB for N=2 (cheap to build in XLA).
    """
    n = x2d.shape[0]
    chunks = []
    for a in range(2):
        for b in range(2):
            taps = []
            for di in range(3):
                for dj in range(3):
                    s = x2d[:, a + di: a + di + 2 * HP - 1: 2,
                               b + dj: b + dj + 2 * WP - 1: 2]          # (N, 25, 159)
                    s = jnp.pad(s, ((0, 0), (0, 0), (0, SROW - WP)))     # (N, 25, 160)
                    s = s.reshape(n, S1)                                 # (N, 4000)
                    taps.append(jnp.pad(s, ((0, 0), (0, S1PAD - S1))))   # (N, 4096)
            chunks.append(jnp.stack(taps, axis=1))                       # (N, 9, 4096)
    return jnp.concatenate(chunks, axis=2)                               # (N, 9, 16384)


def prepare_params(params):
    """One-time conversion of PyTorch-layout params into kernel-ready layouts.

    The ~56 MiB fc1 weight is transposed, scattered into the padded (row-stride
    160, slab-width 3712) feature layout and cast to bf16 exactly once; the conv2
    weight is reshaped tap-major into a single (64, 576) bf16 matrix.
    """
    _detect_roll_semantics()
    w1, b1c, w2, b2c, fw1, fb1, fw2, fb2 = params

    w1f = w1.reshape(C1, 9)                                   # (64, 9)
    b1 = b1c.reshape(C1, 1)
    # w2mat[out, (3*di+dj)*C1 + in] = w2[out, in, di, dj]
    w2mat = jnp.transpose(w2, (0, 2, 3, 1)).reshape(C2, 9 * C1).astype(jnp.bfloat16)
    b2 = b2c.reshape(C2, 1)

    w = fw1.reshape(HID, C2, H2, W2)                          # (64, 64, 23, 157)
    w = jnp.pad(w, ((0, 0), (0, 0), (0, 0), (0, SROW - W2)))  # (64, 64, 23, 160)
    w = w.reshape(HID, C2, S2F)                               # (64, 64, 3680)
    w = jnp.pad(w, ((0, 0), (0, 0), (0, S2PAD - S2F)))        # (64, 64, 3712), pad = 0
    w1p = jnp.transpose(w.reshape(HID, FEAT_PAD)).astype(jnp.bfloat16)  # (237568, 64)

    return (w1f, b1, w2mat, b2, w1p,
            fb1.reshape(1, HID), fw2.T, fb2.reshape(1, NCLS))


@jax.jit
def classifier_forward(x, prep):
    """x: (N, 1, 52, 320) float32 NCHW, prep = prepare_params(params)."""
    w1f, b1, w2mat, b2, w1p, fb1r, w2t, fb2r = prep
    n = x.shape[0]

    patches = _conv1_pool_patches(x[:, 0])                    # (N, 9, 16384)
    feat3 = _conv_fused(patches, w1f, b1, w2mat, b2)          # (N, 64, 3712) bf16

    # TODO(synk): nn.Dropout(p=0.5) is stochastic; treated as identity (eval-mode).
    feat = feat3.reshape(n, FEAT_PAD)                         # bf16, padded layout

    if NCORES == 1:
        # Single-TC chips (v5e/v6e): one kernel, epilogue fused into last K step.
        return _fc_fused(feat, w1p, fb1r, w2t, fb2r)          # (N, 4) f32
    # v7x: split the weight stream across the two TensorCores, tiny epilogue.
    partials = _fc_partial(feat, w1p)                         # (2, N, 64) f32
    return _fc_epilogue(partials, fb1r, w2t, fb2r)            # (N, 4) f32


# ----------------------------- reference & setup -----------------------------

def reference_forward(x, params):
    """Pure-JAX reference matching the PyTorch forward exactly (f32, HIGHEST)."""
    w1, b1c, w2, b2c, fw1, fb1, fw2, fb2 = params
    hp = lax.Precision.HIGHEST
    y = lax.conv_general_dilated(x, w1, (1, 1), "VALID",
                                 dimension_numbers=("NCHW", "OIHW", "NCHW"),
                                 precision=hp)
    y = jnp.maximum(y + b1c[None, :, None, None], 0.0)
    n, c, h, w = y.shape
    y = y.reshape(n, c, h // 2, 2, w // 2, 2).max(axis=(3, 5))
    y = lax.conv_general_dilated(y, w2, (1, 1), "VALID",
                                 dimension_numbers=("NCHW", "OIHW", "NCHW"),
                                 precision=hp)
    y = jnp.maximum(y + b2c[None, :, None, None], 0.0)
    y = y.reshape(n, -1)
    y = jnp.maximum(jnp.dot(y, fw1.T, precision=hp) + fb1, 0.0)
    logits = jnp.dot(y, fw2.T, precision=hp) + fb2
    return jax.nn.softmax(logits, axis=1)


def init_params(key):
    """Deterministic synthetic parameters, torch-style U(-1/sqrt(fan_in), ...)."""
    ks = jax.random.split(key, 8)

    def uni(k, shape, fan_in):
        bound = 1.0 / float(np.sqrt(fan_in))
        return jax.random.uniform(k, shape, jnp.float32, -bound, bound)

    w1 = uni(ks[0], (C1, 1, 3, 3), 9)
    b1 = uni(ks[1], (C1,), 9)
    w2 = uni(ks[2], (C2, C1, 3, 3), C1 * 9)
    b2 = uni(ks[3], (C2,), C1 * 9)
    fw1 = uni(ks[4], (HID, FEAT), FEAT)
    fb1 = uni(ks[5], (HID,), FEAT)
    fw2 = uni(ks[6], (NCLS, HID), HID)
    fb2 = uni(ks[7], (NCLS,), HID)
    return (w1, b1, w2, b2, fw1, fb1, fw2, fb2)


if __name__ == "__main__":
    key = jax.random.PRNGKey(0)
    kx, kp = jax.random.split(key)
    batch = 2
    x = jax.random.normal(kx, (batch, 1, H_IN, W_IN), jnp.float32)
    params = init_params(kp)
    prep = prepare_params(params)          # one-time weight prep (includes roll probe)

    out = jax.block_until_ready(classifier_forward(x, prep))
    assert out.shape == (batch, NCLS) and out.dtype == jnp.float32
    assert bool(jnp.all(jnp.isfinite(out)))

    ref = jax.block_until_ready(reference_forward(x, params))
    err = float(jnp.max(jnp.abs(out - ref)))
    assert err < 2e-3, f"mismatch vs pure-JAX reference: max abs err = {err}"

    print("KERNEL_OK")
</pallas_src>

<mosaic_0001>
module attributes {stable_mosaic.version = 11 : i64} {
  func.func @k(%arg0: memref<8x128xf32, #tpu.memory_space<vmem>>, %arg1: memref<8x128xf32, #tpu.memory_space<vmem>>) attributes {dimension_semantics = [], scalar_prefetch = 0 : i64, scratch_operands = 0 : i64, tpu.core_type = #tpu.core_type<tc>} {
    %c0 = arith.constant 0 : index
    %c0_0 = arith.constant 0 : index
    %0 = vector.load %arg0[%c0, %c0_0] : memref<8x128xf32, #tpu.memory_space<vmem>>, vector<8x128xf32>
    %c1_i32 = arith.constant 1 : i32
    %1 = tpu.dynamic_rotate %0 by %c1_i32 dim 1 : vector<8x128xf32>, i32 -> vector<8x128xf32>
    %c0_1 = arith.constant 0 : index
    %c0_2 = arith.constant 0 : index
    %2 = vector.load %arg1[%c0_1, %c0_2] : memref<8x128xf32, #tpu.memory_space<vmem>>, vector<8x128xf32>
    tpu.vector_store %arg1[%c0_1, %c0_2], %1 {strides = array<i32>} : memref<8x128xf32, #tpu.memory_space<vmem>>, vector<8x128xf32>,
    return
  }
}

</mosaic_0001>

<llo_original>
// kernel: tpu_custom_call.1
$region0: #{tpu_custom_call.1}
  #allocation0 [shape = 'u32[]', space=smem, size = 0x4, offset = 0x4, fixed_abs, tag = 'smem constant byte address 0x4 - core index']
  #allocation1 [shape = 'u32[72,128]{1,0:T(1,128)}', space=vmem, size = 0x9000, scoped, tag = 'internal scratch']
  %s0 = inlined_call_operand.hbm [shape: f32[8,128], index: 0, kind: input, shape index: {}]
  %s1 = inlined_call_operand.hbm [shape: f32[8,128], index: 1, kind: output, shape index: {}]
  %s2 = sld [smem:[#allocation0]]
  $region18: #{tpu_custom_call.1} parent=0
    _
  %s4 = ssub.s32 1, %s2
  %s5 = scalar_select 0, %s4, %s2
  $region1: #{tpu_custom_call.1} parent=0
    #allocation2 [shape = 'u8[4096]{0}', space=vmem, size = 0x1000, scoped, tag = 'input window, operand 0, single buffered']
    #allocation3 [shape = 's32[1]{0}', space=sflag, size = 0x4, scoped, tag = 'scoped memory for tpu_custom_call.1']
    #allocation4 [shape = 's32[1]{0}', space=sflag, size = 0x4, scoped, tag = 'scoped memory for tpu_custom_call.1']
    #allocation5 [shape = 'u8[4096]{0}', space=vmem, size = 0x1000, scoped, tag = 'output window, operand 0, single buffered']
    %6 = vsyncpa [#allocation3], 0
    %7 = vsyncpa [#allocation4], 0
    // Predicated region
    $region2: #{tpu_custom_call.1} parent=1 // pred_check
      _
    $region3: #{tpu_custom_call.1} parent=1 // pred_check_branch
      %9 = sbr.rel (0) target = $region5
    $region4: #{tpu_custom_call.1} parent=1 // pred_region
      %11 = vsyncadd [#allocation3], 0
      %s13 = sshll.u32 %s0, 4
      %s14 = int_to_ptr.hbm [resolvable:$true] %s13
      %s15 = sshll.u32 [#allocation2], 4
      %s16 = int_to_ptr.vmem [resolvable:$true] %s15
      %18 = dma.hbm_to_vmem [thread:$0]  %s14, 128, %s16, [#allocation3]
    $region5: #{tpu_custom_call.1} parent=1 // pred_fallthru
      _
    // Predicated region
    $region6: #{tpu_custom_call.1} parent=1 // pred_check
      _
    $region7: #{tpu_custom_call.1} parent=1 // pred_check_branch
      %20 = sbr.rel (0) target = $region9
    $region8: #{tpu_custom_call.1} parent=1 // pred_region
      %22 = dma.done [#allocation3], 128
    $region9: #{tpu_custom_call.1} parent=1 // pred_fallthru
      _
    %v23 = vld [vmem:[#allocation2] sm:$0xff]
    %24 = vrot.lane.b32.xlu0 %v23, 1
    %v25 = vpop.permute.xlu0 %24
    %26 = vst [vmem:[#allocation5] sm:$0xff] %v25
    // Predicated region
    $region10: #{tpu_custom_call.1} parent=1 // pred_check
      _
    $region11: #{tpu_custom_call.1} parent=1 // pred_check_branch
      %28 = sbr.rel (0) target = $region13
    $region12: #{tpu_custom_call.1} parent=1 // pred_region
      %30 = vsyncadd [#allocation4], 0
      %s32 = sshll.u32 [#allocation5], 4
      %s33 = int_to_ptr.vmem [resolvable:$true] %s32
      %s34 = sshll.u32 %s1, 4
      %s35 = int_to_ptr.hbm [resolvable:$true] %s34
      %37 = dma.vmem_to_hbm [thread:$0]  %s33, 128, %s35, [#allocation4]
    $region13: #{tpu_custom_call.1} parent=1 // pred_fallthru
      _
    // Predicated region
    $region14: #{tpu_custom_call.1} parent=1 // pred_check
      _
    $region15: #{tpu_custom_call.1} parent=1 // pred_check_branch
      %39 = sbr.rel (0) target = $region17
    $region16: #{tpu_custom_call.1} parent=1 // pred_region
      %41 = dma.done [#allocation4], 128
    $region17: #{tpu_custom_call.1} parent=1 // pred_fallthru
      _
    %42 = vsyncpa [#allocation3], 1
    %43 = vsyncpa [#allocation4], 1

</llo_original>
